<compile_context>
chip_gen: v6e
topology: v6e:2x2x1
jax: 0.10.0
libtpu: 0.0.40
codegen_flags: <defaults>
</compile_context>

<pallas_src>
import jax
import jax.numpy as jnp
from jax.experimental import pallas as pl
from jax.experimental.pallas import tpu as pltpu


def _lstm_joint_kernel(x_ref, wih_ref, whh_ref, b_ref, wlin_ref, blin_ref, y_ref):
    """Single invocation: full LSTM recurrence over T + Linear(H,1) head, all in vregs."""
    T, B, I = x_ref.shape
    H = whh_ref.shape[0]                      # whh_ref: (H, 4H)

    whh = whh_ref[...]                        # (H, 4H) resident in vregs for the loop
    wlin = wlin_ref[...]                      # (1, H)

    # ---- x path: input projections for ALL timesteps at once (VPU broadcast-MAC) with
    #      the summed gate bias fused in. Stays in vregs (~T vregs at (T,B,4H)=(8,8,128)).
    #      I is tiny (1); for larger I this would become a single (T*B,I)@(I,4H) MXU GEMM.
    xg = jnp.broadcast_to(b_ref[...].astype(jnp.float32), (T, B, 4 * H))
    for i in range(I):
        xg = xg + x_ref[:, :, i:i + 1].astype(jnp.float32) * wih_ref[i:i + 1, :]

    # ---- recurrence: static Python loop over T; per step one (B,H)@(H,4H) MXU matmul
    #      plus 3 EUP transcendentals. PyTorch gate order [i, f, g, o]. ----
    h = jnp.zeros((B, H), jnp.float32)
    c = jnp.zeros((B, H), jnp.float32)
    hs = []
    for t in range(T):
        gates = xg[t] + jnp.dot(h, whh, preferred_element_type=jnp.float32)   # (B, 4H)
        # sigmoid over the full 128-lane gates vreg via exact tanh identity (1 EUP op),
        # tanh over the full gates vreg (1 EUP op); slices are free VPU/XLU work.
        sg = 0.5 * jnp.tanh(0.5 * gates) + 0.5
        tg = jnp.tanh(gates)
        i_g = sg[:, 0 * H:1 * H]
        f_g = sg[:, 1 * H:2 * H]
        g_g = tg[:, 2 * H:3 * H]
        o_g = sg[:, 3 * H:4 * H]
        c = f_g * c + i_g * g_g
        h = o_g * jnp.tanh(c)                 # third EUP op of the step
        hs.append(h)

    # ---- head: Linear(H, 1) for the whole sequence as one VPU multiply + lane reduce,
    #      written once as a dense (T, B) block. ----
    hs_all = jnp.stack(hs, axis=0)                                   # (T, B, H)
    y = jnp.sum(hs_all * wlin, axis=-1) + blin_ref[0]                # (T, B)
    y_ref[...] = y.astype(y_ref.dtype)


def joint_model_forward(x, params):
    """x: (B, T, input_size) batch_first  ->  (B, T, 1), matching JointModel.forward."""
    x = x.astype(jnp.float32)
    B, T, I = x.shape
    H = params["w_hh"].shape[1]               # w_hh: (4H, H)

    # Pre-arrange parameters for the kernel (right-multiplication layout).
    wih_t = params["w_ih"].T.astype(jnp.float32)                            # (I, 4H)
    whh_t = params["w_hh"].T.astype(jnp.float32)                            # (H, 4H)
    bias = (params["b_ih"] + params["b_hh"])[None, :].astype(jnp.float32)   # (1, 4H)
    wlin = params["w_lin"].astype(jnp.float32)                              # (1, H)
    blin = params["b_lin"].astype(jnp.float32)                              # (1,)

    x_tm = jnp.transpose(x, (1, 0, 2))        # time-major (T, B, I)

    y_tm = pl.pallas_call(
        _lstm_joint_kernel,
        out_shape=jax.ShapeDtypeStruct((T, B), jnp.float32),
        in_specs=[
            pl.BlockSpec(memory_space=pltpu.MemorySpace.VMEM),   # x (T, B, I)
            pl.BlockSpec(memory_space=pltpu.MemorySpace.VMEM),   # W_ih^T (I, 4H)
            pl.BlockSpec(memory_space=pltpu.MemorySpace.VMEM),   # W_hh^T (H, 4H)
            pl.BlockSpec(memory_space=pltpu.MemorySpace.VMEM),   # b_ih + b_hh (1, 4H)
            pl.BlockSpec(memory_space=pltpu.MemorySpace.VMEM),   # W_lin (1, H)
            pl.BlockSpec(memory_space=pltpu.MemorySpace.SMEM),   # b_lin scalar (1,)
        ],
        out_specs=pl.BlockSpec(memory_space=pltpu.MemorySpace.VMEM),
    )(x_tm, wih_t, whh_t, bias, wlin, blin)

    return jnp.transpose(y_tm)[:, :, None]    # (B, T, 1)


def init_params(key, input_size, hidden_size):
    """Deterministic init matching the PyTorch parameter shapes (uniform(-k, k), k = 1/sqrt(H))."""
    k = 1.0 / jnp.sqrt(hidden_size)
    ks = jax.random.split(key, 6)
    return {
        "w_ih": jax.random.uniform(ks[0], (4 * hidden_size, input_size), jnp.float32, -k, k),
        "w_hh": jax.random.uniform(ks[1], (4 * hidden_size, hidden_size), jnp.float32, -k, k),
        "b_ih": jax.random.uniform(ks[2], (4 * hidden_size,), jnp.float32, -k, k),
        "b_hh": jax.random.uniform(ks[3], (4 * hidden_size,), jnp.float32, -k, k),
        "w_lin": jax.random.uniform(ks[4], (1, hidden_size), jnp.float32, -k, k),
        "b_lin": jax.random.uniform(ks[5], (1,), jnp.float32, -k, k),
    }


def reference_forward(x, params):
    """Pure-JAX reference (lax.scan) mirroring torch.nn.LSTM + Linear."""
    x = x.astype(jnp.float32)
    w_ih, w_hh = params["w_ih"], params["w_hh"]
    b = params["b_ih"] + params["b_hh"]
    H = w_hh.shape[1]
    B = x.shape[0]

    def step(carry, x_t):
        h, c = carry
        gates = x_t @ w_ih.T + h @ w_hh.T + b
        i_g = jax.nn.sigmoid(gates[:, 0 * H:1 * H])
        f_g = jax.nn.sigmoid(gates[:, 1 * H:2 * H])
        g_g = jnp.tanh(gates[:, 2 * H:3 * H])
        o_g = jax.nn.sigmoid(gates[:, 3 * H:4 * H])
        c = f_g * c + i_g * g_g
        h = o_g * jnp.tanh(c)
        return (h, c), h

    h0 = jnp.zeros((B, H), jnp.float32)
    c0 = jnp.zeros((B, H), jnp.float32)
    _, hs = jax.lax.scan(step, (h0, c0), jnp.transpose(x, (1, 0, 2)))   # (T, B, H)
    hs = jnp.transpose(hs, (1, 0, 2))                                   # (B, T, H)
    return hs @ params["w_lin"].T + params["b_lin"]                     # (B, T, 1)


if __name__ == "__main__":
    # Small shapes consistent with the module: batch=8, seq=8, input_size=1, hidden=32.
    B, T, I, H = 8, 8, 1, 32

    key = jax.random.PRNGKey(0)
    k_x, k_p = jax.random.split(key)
    x = jax.random.normal(k_x, (B, T, I), jnp.float32)
    params = init_params(k_p, I, H)

    y = joint_model_forward(x, params)
    y = jax.block_until_ready(y)

    y_ref = reference_forward(x, params)
    assert y.shape == (B, T, 1), y.shape
    assert jnp.allclose(y, y_ref, rtol=1e-4, atol=1e-4), float(jnp.max(jnp.abs(y - y_ref)))

    print("KERNEL_OK")
</pallas_src>

<mosaic_0001>
module attributes {stable_mosaic.version = 11 : i64} {
  func.func @_lstm_joint_kernel(%arg0: memref<8x8x1xf32, #tpu.memory_space<vmem>>, %arg1: memref<1x128xf32, #tpu.memory_space<vmem>>, %arg2: memref<32x128xf32, #tpu.memory_space<vmem>>, %arg3: memref<1x128xf32, #tpu.memory_space<vmem>>, %arg4: memref<1x32xf32, #tpu.memory_space<vmem>>, %arg5: memref<1xf32, #tpu.memory_space<smem>>, %arg6: memref<8x8xf32, #tpu.memory_space<vmem>>) attributes {dimension_semantics = [], scalar_prefetch = 0 : i64, scratch_operands = 0 : i64, tpu.core_type = #tpu.core_type<tc>} {
    %c0 = arith.constant 0 : index
    %c0_0 = arith.constant 0 : index
    %0 = vector.load %arg2[%c0, %c0_0] : memref<32x128xf32, #tpu.memory_space<vmem>>, vector<32x128xf32>
    %c0_1 = arith.constant 0 : index
    %c0_2 = arith.constant 0 : index
    %1 = vector.load %arg4[%c0_1, %c0_2] : memref<1x32xf32, #tpu.memory_space<vmem>>, vector<1x32xf32>
    %c0_3 = arith.constant 0 : index
    %c0_4 = arith.constant 0 : index
    %2 = vector.load %arg3[%c0_3, %c0_4] : memref<1x128xf32, #tpu.memory_space<vmem>>, vector<1x128xf32>
    %3 = vector.shape_cast %2 : vector<1x128xf32> to vector<1x1x128xf32>
    %4 = vector.broadcast %3 : vector<1x1x128xf32> to vector<8x8x128xf32>
    %c0_5 = arith.constant 0 : index
    %c0_6 = arith.constant 0 : index
    %c0_7 = arith.constant 0 : index
    %5 = vector.load %arg0[%c0_5, %c0_6, %c0_7] : memref<8x8x1xf32, #tpu.memory_space<vmem>>, vector<8x8x1xf32>
    %c0_8 = arith.constant 0 : index
    %c0_9 = arith.constant 0 : index
    %6 = vector.load %arg1[%c0_8, %c0_9] : memref<1x128xf32, #tpu.memory_space<vmem>>, vector<1x128xf32>
    %7 = vector.shape_cast %6 : vector<1x128xf32> to vector<1x1x128xf32>
    %8 = vector.broadcast %5 : vector<8x8x1xf32> to vector<8x8x128xf32>
    %9 = vector.broadcast %7 : vector<1x1x128xf32> to vector<8x8x128xf32>
    %10 = arith.mulf %8, %9 : vector<8x8x128xf32>
    %11 = arith.addf %4, %10 : vector<8x8x128xf32>
    %cst = arith.constant 0.000000e+00 : f32
    %12 = vector.broadcast %cst : f32 to vector<8x32xf32>
    %cst_10 = arith.constant 0.000000e+00 : f32
    %13 = vector.broadcast %cst_10 : f32 to vector<8x32xf32>
    %14 = vector.extract_strided_slice %11 {offsets = [0, 0, 0], sizes = [1, 8, 128], strides = [1, 1, 1]} : vector<8x8x128xf32> to vector<1x8x128xf32>
    %15 = vector.shape_cast %14 : vector<1x8x128xf32> to vector<8x128xf32>
    %cst_11 = arith.constant dense<0.000000e+00> : vector<8x128xf32>
    %16 = tpu.matmul %12, %0, %cst_11 {dimension_numbers = #tpu.dot_dimension_numbers<[1], [0], [0], [1], [0, 0, 1, 1], [], []>} : vector<8x32xf32>, vector<32x128xf32>, vector<8x128xf32> -> vector<8x128xf32>
    %17 = arith.addf %15, %16 : vector<8x128xf32>
    %cst_12 = arith.constant 5.000000e-01 : f32
    %18 = vector.broadcast %cst_12 : f32 to vector<8x128xf32>
    %19 = arith.mulf %18, %17 : vector<8x128xf32>
    %20 = math.tanh %19 : vector<8x128xf32>
    %cst_13 = arith.constant 5.000000e-01 : f32
    %21 = vector.broadcast %cst_13 : f32 to vector<8x128xf32>
    %22 = arith.mulf %21, %20 : vector<8x128xf32>
    %cst_14 = arith.constant 5.000000e-01 : f32
    %23 = vector.broadcast %cst_14 : f32 to vector<8x128xf32>
    %24 = arith.addf %22, %23 : vector<8x128xf32>
    %25 = math.tanh %17 : vector<8x128xf32>
    %26 = vector.extract_strided_slice %24 {offsets = [0, 0], sizes = [8, 32], strides = [1, 1]} : vector<8x128xf32> to vector<8x32xf32>
    %27 = vector.extract_strided_slice %24 {offsets = [0, 32], sizes = [8, 32], strides = [1, 1]} : vector<8x128xf32> to vector<8x32xf32>
    %28 = vector.extract_strided_slice %25 {offsets = [0, 64], sizes = [8, 32], strides = [1, 1]} : vector<8x128xf32> to vector<8x32xf32>
    %29 = vector.extract_strided_slice %24 {offsets = [0, 96], sizes = [8, 32], strides = [1, 1]} : vector<8x128xf32> to vector<8x32xf32>
    %30 = arith.mulf %27, %13 : vector<8x32xf32>
    %31 = arith.mulf %26, %28 : vector<8x32xf32>
    %32 = arith.addf %30, %31 : vector<8x32xf32>
    %33 = math.tanh %32 : vector<8x32xf32>
    %34 = arith.mulf %29, %33 : vector<8x32xf32>
    %35 = vector.extract_strided_slice %11 {offsets = [1, 0, 0], sizes = [1, 8, 128], strides = [1, 1, 1]} : vector<8x8x128xf32> to vector<1x8x128xf32>
    %36 = vector.shape_cast %35 : vector<1x8x128xf32> to vector<8x128xf32>
    %cst_15 = arith.constant dense<0.000000e+00> : vector<8x128xf32>
    %37 = tpu.matmul %34, %0, %cst_15 {dimension_numbers = #tpu.dot_dimension_numbers<[1], [0], [0], [1], [0, 0, 1, 1], [], []>} : vector<8x32xf32>, vector<32x128xf32>, vector<8x128xf32> -> vector<8x128xf32>
    %38 = arith.addf %36, %37 : vector<8x128xf32>
    %cst_16 = arith.constant 5.000000e-01 : f32
    %39 = vector.broadcast %cst_16 : f32 to vector<8x128xf32>
    %40 = arith.mulf %39, %38 : vector<8x128xf32>
    %41 = math.tanh %40 : vector<8x128xf32>
    %cst_17 = arith.constant 5.000000e-01 : f32
    %42 = vector.broadcast %cst_17 : f32 to vector<8x128xf32>
    %43 = arith.mulf %42, %41 : vector<8x128xf32>
    %cst_18 = arith.constant 5.000000e-01 : f32
    %44 = vector.broadcast %cst_18 : f32 to vector<8x128xf32>
    %45 = arith.addf %43, %44 : vector<8x128xf32>
    %46 = math.tanh %38 : vector<8x128xf32>
    %47 = vector.extract_strided_slice %45 {offsets = [0, 0], sizes = [8, 32], strides = [1, 1]} : vector<8x128xf32> to vector<8x32xf32>
    %48 = vector.extract_strided_slice %45 {offsets = [0, 32], sizes = [8, 32], strides = [1, 1]} : vector<8x128xf32> to vector<8x32xf32>
    %49 = vector.extract_strided_slice %46 {offsets = [0, 64], sizes = [8, 32], strides = [1, 1]} : vector<8x128xf32> to vector<8x32xf32>
    %50 = vector.extract_strided_slice %45 {offsets = [0, 96], sizes = [8, 32], strides = [1, 1]} : vector<8x128xf32> to vector<8x32xf32>
    %51 = arith.mulf %48, %32 : vector<8x32xf32>
    %52 = arith.mulf %47, %49 : vector<8x32xf32>
    %53 = arith.addf %51, %52 : vector<8x32xf32>
    %54 = math.tanh %53 : vector<8x32xf32>
    %55 = arith.mulf %50, %54 : vector<8x32xf32>
    %56 = vector.extract_strided_slice %11 {offsets = [2, 0, 0], sizes = [1, 8, 128], strides = [1, 1, 1]} : vector<8x8x128xf32> to vector<1x8x128xf32>
    %57 = vector.shape_cast %56 : vector<1x8x128xf32> to vector<8x128xf32>
    %cst_19 = arith.constant dense<0.000000e+00> : vector<8x128xf32>
    %58 = tpu.matmul %55, %0, %cst_19 {dimension_numbers = #tpu.dot_dimension_numbers<[1], [0], [0], [1], [0, 0, 1, 1], [], []>} : vector<8x32xf32>, vector<32x128xf32>, vector<8x128xf32> -> vector<8x128xf32>
    %59 = arith.addf %57, %58 : vector<8x128xf32>
    %cst_20 = arith.constant 5.000000e-01 : f32
    %60 = vector.broadcast %cst_20 : f32 to vector<8x128xf32>
    %61 = arith.mulf %60, %59 : vector<8x128xf32>
    %62 = math.tanh %61 : vector<8x128xf32>
    %cst_21 = arith.constant 5.000000e-01 : f32
    %63 = vector.broadcast %cst_21 : f32 to vector<8x128xf32>
    %64 = arith.mulf %63, %62 : vector<8x128xf32>
    %cst_22 = arith.constant 5.000000e-01 : f32
    %65 = vector.broadcast %cst_22 : f32 to vector<8x128xf32>
    %66 = arith.addf %64, %65 : vector<8x128xf32>
    %67 = math.tanh %59 : vector<8x128xf32>
    %68 = vector.extract_strided_slice %66 {offsets = [0, 0], sizes = [8, 32], strides = [1, 1]} : vector<8x128xf32> to vector<8x32xf32>
    %69 = vector.extract_strided_slice %66 {offsets = [0, 32], sizes = [8, 32], strides = [1, 1]} : vector<8x128xf32> to vector<8x32xf32>
    %70 = vector.extract_strided_slice %67 {offsets = [0, 64], sizes = [8, 32], strides = [1, 1]} : vector<8x128xf32> to vector<8x32xf32>
    %71 = vector.extract_strided_slice %66 {offsets = [0, 96], sizes = [8, 32], strides = [1, 1]} : vector<8x128xf32> to vector<8x32xf32>
    %72 = arith.mulf %69, %53 : vector<8x32xf32>
    %73 = arith.mulf %68, %70 : vector<8x32xf32>
    %74 = arith.addf %72, %73 : vector<8x32xf32>
    %75 = math.tanh %74 : vector<8x32xf32>
    %76 = arith.mulf %71, %75 : vector<8x32xf32>
    %77 = vector.extract_strided_slice %11 {offsets = [3, 0, 0], sizes = [1, 8, 128], strides = [1, 1, 1]} : vector<8x8x128xf32> to vector<1x8x128xf32>
    %78 = vector.shape_cast %77 : vector<1x8x128xf32> to vector<8x128xf32>
    %cst_23 = arith.constant dense<0.000000e+00> : vector<8x128xf32>
    %79 = tpu.matmul %76, %0, %cst_23 {dimension_numbers = #tpu.dot_dimension_numbers<[1], [0], [0], [1], [0, 0, 1, 1], [], []>} : vector<8x32xf32>, vector<32x128xf32>, vector<8x128xf32> -> vector<8x128xf32>
    %80 = arith.addf %78, %79 : vector<8x128xf32>
    %cst_24 = arith.constant 5.000000e-01 : f32
    %81 = vector.broadcast %cst_24 : f32 to vector<8x128xf32>
    %82 = arith.mulf %81, %80 : vector<8x128xf32>
    %83 = math.tanh %82 : vector<8x128xf32>
    %cst_25 = arith.constant 5.000000e-01 : f32
    %84 = vector.broadcast %cst_25 : f32 to vector<8x128xf32>
    %85 = arith.mulf %84, %83 : vector<8x128xf32>
    %cst_26 = arith.constant 5.000000e-01 : f32
    %86 = vector.broadcast %cst_26 : f32 to vector<8x128xf32>
    %87 = arith.addf %85, %86 : vector<8x128xf32>
    %88 = math.tanh %80 : vector<8x128xf32>
    %89 = vector.extract_strided_slice %87 {offsets = [0, 0], sizes = [8, 32], strides = [1, 1]} : vector<8x128xf32> to vector<8x32xf32>
    %90 = vector.extract_strided_slice %87 {offsets = [0, 32], sizes = [8, 32], strides = [1, 1]} : vector<8x128xf32> to vector<8x32xf32>
    %91 = vector.extract_strided_slice %88 {offsets = [0, 64], sizes = [8, 32], strides = [1, 1]} : vector<8x128xf32> to vector<8x32xf32>
    %92 = vector.extract_strided_slice %87 {offsets = [0, 96], sizes = [8, 32], strides = [1, 1]} : vector<8x128xf32> to vector<8x32xf32>
    %93 = arith.mulf %90, %74 : vector<8x32xf32>
    %94 = arith.mulf %89, %91 : vector<8x32xf32>
    %95 = arith.addf %93, %94 : vector<8x32xf32>
    %96 = math.tanh %95 : vector<8x32xf32>
    %97 = arith.mulf %92, %96 : vector<8x32xf32>
    %98 = vector.extract_strided_slice %11 {offsets = [4, 0, 0], sizes = [1, 8, 128], strides = [1, 1, 1]} : vector<8x8x128xf32> to vector<1x8x128xf32>
    %99 = vector.shape_cast %98 : vector<1x8x128xf32> to vector<8x128xf32>
    %cst_27 = arith.constant dense<0.000000e+00> : vector<8x128xf32>
    %100 = tpu.matmul %97, %0, %cst_27 {dimension_numbers = #tpu.dot_dimension_numbers<[1], [0], [0], [1], [0, 0, 1, 1], [], []>} : vector<8x32xf32>, vector<32x128xf32>, vector<8x128xf32> -> vector<8x128xf32>
    %101 = arith.addf %99, %100 : vector<8x128xf32>
    %cst_28 = arith.constant 5.000000e-01 : f32
    %102 = vector.broadcast %cst_28 : f32 to vector<8x128xf32>
    %103 = arith.mulf %102, %101 : vector<8x128xf32>
    %104 = math.tanh %103 : vector<8x128xf32>
    %cst_29 = arith.constant 5.000000e-01 : f32
    %105 = vector.broadcast %cst_29 : f32 to vector<8x128xf32>
    %106 = arith.mulf %105, %104 : vector<8x128xf32>
    %cst_30 = arith.constant 5.000000e-01 : f32
    %107 = vector.broadcast %cst_30 : f32 to vector<8x128xf32>
    %108 = arith.addf %106, %107 : vector<8x128xf32>
    %109 = math.tanh %101 : vector<8x128xf32>
    %110 = vector.extract_strided_slice %108 {offsets = [0, 0], sizes = [8, 32], strides = [1, 1]} : vector<8x128xf32> to vector<8x32xf32>
    %111 = vector.extract_strided_slice %108 {offsets = [0, 32], sizes = [8, 32], strides = [1, 1]} : vector<8x128xf32> to vector<8x32xf32>
    %112 = vector.extract_strided_slice %109 {offsets = [0, 64], sizes = [8, 32], strides = [1, 1]} : vector<8x128xf32> to vector<8x32xf32>
    %113 = vector.extract_strided_slice %108 {offsets = [0, 96], sizes = [8, 32], strides = [1, 1]} : vector<8x128xf32> to vector<8x32xf32>
    %114 = arith.mulf %111, %95 : vector<8x32xf32>
    %115 = arith.mulf %110, %112 : vector<8x32xf32>
    %116 = arith.addf %114, %115 : vector<8x32xf32>
    %117 = math.tanh %116 : vector<8x32xf32>
    %118 = arith.mulf %113, %117 : vector<8x32xf32>
    %119 = vector.extract_strided_slice %11 {offsets = [5, 0, 0], sizes = [1, 8, 128], strides = [1, 1, 1]} : vector<8x8x128xf32> to vector<1x8x128xf32>
    %120 = vector.shape_cast %119 : vector<1x8x128xf32> to vector<8x128xf32>
    %cst_31 = arith.constant dense<0.000000e+00> : vector<8x128xf32>
    %121 = tpu.matmul %118, %0, %cst_31 {dimension_numbers = #tpu.dot_dimension_numbers<[1], [0], [0], [1], [0, 0, 1, 1], [], []>} : vector<8x32xf32>, vector<32x128xf32>, vector<8x128xf32> -> vector<8x128xf32>
    %122 = arith.addf %120, %121 : vector<8x128xf32>
    %cst_32 = arith.constant 5.000000e-01 : f32
    %123 = vector.broadcast %cst_32 : f32 to vector<8x128xf32>
    %124 = arith.mulf %123, %122 : vector<8x128xf32>
    %125 = math.tanh %124 : vector<8x128xf32>
    %cst_33 = arith.constant 5.000000e-01 : f32
    %126 = vector.broadcast %cst_33 : f32 to vector<8x128xf32>
    %127 = arith.mulf %126, %125 : vector<8x128xf32>
    %cst_34 = arith.constant 5.000000e-01 : f32
    %128 = vector.broadcast %cst_34 : f32 to vector<8x128xf32>
    %129 = arith.addf %127, %128 : vector<8x128xf32>
    %130 = math.tanh %122 : vector<8x128xf32>
    %131 = vector.extract_strided_slice %129 {offsets = [0, 0], sizes = [8, 32], strides = [1, 1]} : vector<8x128xf32> to vector<8x32xf32>
    %132 = vector.extract_strided_slice %129 {offsets = [0, 32], sizes = [8, 32], strides = [1, 1]} : vector<8x128xf32> to vector<8x32xf32>
    %133 = vector.extract_strided_slice %130 {offsets = [0, 64], sizes = [8, 32], strides = [1, 1]} : vector<8x128xf32> to vector<8x32xf32>
    %134 = vector.extract_strided_slice %129 {offsets = [0, 96], sizes = [8, 32], strides = [1, 1]} : vector<8x128xf32> to vector<8x32xf32>
    %135 = arith.mulf %132, %116 : vector<8x32xf32>
    %136 = arith.mulf %131, %133 : vector<8x32xf32>
    %137 = arith.addf %135, %136 : vector<8x32xf32>
    %138 = math.tanh %137 : vector<8x32xf32>
    %139 = arith.mulf %134, %138 : vector<8x32xf32>
    %140 = vector.extract_strided_slice %11 {offsets = [6, 0, 0], sizes = [1, 8, 128], strides = [1, 1, 1]} : vector<8x8x128xf32> to vector<1x8x128xf32>
    %141 = vector.shape_cast %140 : vector<1x8x128xf32> to vector<8x128xf32>
    %cst_35 = arith.constant dense<0.000000e+00> : vector<8x128xf32>
    %142 = tpu.matmul %139, %0, %cst_35 {dimension_numbers = #tpu.dot_dimension_numbers<[1], [0], [0], [1], [0, 0, 1, 1], [], []>} : vector<8x32xf32>, vector<32x128xf32>, vector<8x128xf32> -> vector<8x128xf32>
    %143 = arith.addf %141, %142 : vector<8x128xf32>
    %cst_36 = arith.constant 5.000000e-01 : f32
    %144 = vector.broadcast %cst_36 : f32 to vector<8x128xf32>
    %145 = arith.mulf %144, %143 : vector<8x128xf32>
    %146 = math.tanh %145 : vector<8x128xf32>
    %cst_37 = arith.constant 5.000000e-01 : f32
    %147 = vector.broadcast %cst_37 : f32 to vector<8x128xf32>
    %148 = arith.mulf %147, %146 : vector<8x128xf32>
    %cst_38 = arith.constant 5.000000e-01 : f32
    %149 = vector.broadcast %cst_38 : f32 to vector<8x128xf32>
    %150 = arith.addf %148, %149 : vector<8x128xf32>
    %151 = math.tanh %143 : vector<8x128xf32>
    %152 = vector.extract_strided_slice %150 {offsets = [0, 0], sizes = [8, 32], strides = [1, 1]} : vector<8x128xf32> to vector<8x32xf32>
    %153 = vector.extract_strided_slice %150 {offsets = [0, 32], sizes = [8, 32], strides = [1, 1]} : vector<8x128xf32> to vector<8x32xf32>
    %154 = vector.extract_strided_slice %151 {offsets = [0, 64], sizes = [8, 32], strides = [1, 1]} : vector<8x128xf32> to vector<8x32xf32>
    %155 = vector.extract_strided_slice %150 {offsets = [0, 96], sizes = [8, 32], strides = [1, 1]} : vector<8x128xf32> to vector<8x32xf32>
    %156 = arith.mulf %153, %137 : vector<8x32xf32>
    %157 = arith.mulf %152, %154 : vector<8x32xf32>
    %158 = arith.addf %156, %157 : vector<8x32xf32>
    %159 = math.tanh %158 : vector<8x32xf32>
    %160 = arith.mulf %155, %159 : vector<8x32xf32>
    %161 = vector.extract_strided_slice %11 {offsets = [7, 0, 0], sizes = [1, 8, 128], strides = [1, 1, 1]} : vector<8x8x128xf32> to vector<1x8x128xf32>
    %162 = vector.shape_cast %161 : vector<1x8x128xf32> to vector<8x128xf32>
    %cst_39 = arith.constant dense<0.000000e+00> : vector<8x128xf32>
    %163 = tpu.matmul %160, %0, %cst_39 {dimension_numbers = #tpu.dot_dimension_numbers<[1], [0], [0], [1], [0, 0, 1, 1], [], []>} : vector<8x32xf32>, vector<32x128xf32>, vector<8x128xf32> -> vector<8x128xf32>
    %164 = arith.addf %162, %163 : vector<8x128xf32>
    %cst_40 = arith.constant 5.000000e-01 : f32
    %165 = vector.broadcast %cst_40 : f32 to vector<8x128xf32>
    %166 = arith.mulf %165, %164 : vector<8x128xf32>
    %167 = math.tanh %166 : vector<8x128xf32>
    %cst_41 = arith.constant 5.000000e-01 : f32
    %168 = vector.broadcast %cst_41 : f32 to vector<8x128xf32>
    %169 = arith.mulf %168, %167 : vector<8x128xf32>
    %cst_42 = arith.constant 5.000000e-01 : f32
    %170 = vector.broadcast %cst_42 : f32 to vector<8x128xf32>
    %171 = arith.addf %169, %170 : vector<8x128xf32>
    %172 = math.tanh %164 : vector<8x128xf32>
    %173 = vector.extract_strided_slice %171 {offsets = [0, 0], sizes = [8, 32], strides = [1, 1]} : vector<8x128xf32> to vector<8x32xf32>
    %174 = vector.extract_strided_slice %171 {offsets = [0, 32], sizes = [8, 32], strides = [1, 1]} : vector<8x128xf32> to vector<8x32xf32>
    %175 = vector.extract_strided_slice %172 {offsets = [0, 64], sizes = [8, 32], strides = [1, 1]} : vector<8x128xf32> to vector<8x32xf32>
    %176 = vector.extract_strided_slice %171 {offsets = [0, 96], sizes = [8, 32], strides = [1, 1]} : vector<8x128xf32> to vector<8x32xf32>
    %177 = arith.mulf %174, %158 : vector<8x32xf32>
    %178 = arith.mulf %173, %175 : vector<8x32xf32>
    %179 = arith.addf %177, %178 : vector<8x32xf32>
    %180 = math.tanh %179 : vector<8x32xf32>
    %181 = arith.mulf %176, %180 : vector<8x32xf32>
    %182 = vector.shape_cast %34 : vector<8x32xf32> to vector<1x8x32xf32>
    %183 = vector.shape_cast %55 : vector<8x32xf32> to vector<1x8x32xf32>
    %184 = vector.shape_cast %76 : vector<8x32xf32> to vector<1x8x32xf32>
    %185 = vector.shape_cast %97 : vector<8x32xf32> to vector<1x8x32xf32>
    %186 = vector.shape_cast %118 : vector<8x32xf32> to vector<1x8x32xf32>
    %187 = vector.shape_cast %139 : vector<8x32xf32> to vector<1x8x32xf32>
    %188 = vector.shape_cast %160 : vector<8x32xf32> to vector<1x8x32xf32>
    %189 = vector.shape_cast %181 : vector<8x32xf32> to vector<1x8x32xf32>
    %190 = tpu.concatenate %182, %183, %184, %185, %186, %187, %188, %189 in 0 : vector<1x8x32xf32>, vector<1x8x32xf32>, vector<1x8x32xf32>, vector<1x8x32xf32>, vector<1x8x32xf32>, vector<1x8x32xf32>, vector<1x8x32xf32>, vector<1x8x32xf32> -> vector<8x8x32xf32>
    %191 = vector.shape_cast %1 : vector<1x32xf32> to vector<1x1x32xf32>
    %192 = vector.broadcast %191 : vector<1x1x32xf32> to vector<8x8x32xf32>
    %193 = arith.mulf %190, %192 : vector<8x8x32xf32>
    %cst_43 = arith.constant dense<0.000000e+00> : vector<8x8xf32>
    %194 = vector.multi_reduction <add>, %193, %cst_43 [2] : vector<8x8x32xf32> to vector<8x8xf32>
    %c0_44 = arith.constant 0 : index
    %195 = memref.load %arg5[%c0_44] : memref<1xf32, #tpu.memory_space<smem>>
    %196 = vector.broadcast %195 : f32 to vector<8x8xf32>
    %197 = arith.addf %194, %196 : vector<8x8xf32>
    %c0_45 = arith.constant 0 : index
    %c0_46 = arith.constant 0 : index
    %198 = vector.load %arg6[%c0_45, %c0_46] : memref<8x8xf32, #tpu.memory_space<vmem>>, vector<8x8xf32>
    tpu.vector_store %arg6[%c0_45, %c0_46], %197 {strides = array<i32>} : memref<8x8xf32, #tpu.memory_space<vmem>>, vector<8x8xf32>,
    return
  }
}

</mosaic_0001>

<llo_original>
// kernel: tpu_custom_call.1
$region0: #{tpu_custom_call.1}
  #allocation0 [shape = 'u32[]', space=smem, size = 0x4, offset = 0x4, fixed_abs, tag = 'smem constant byte address 0x4 - core index']
  #allocation1 [shape = 'u32[144,128]{1,0:T(1,128)}', space=vmem, size = 0x12000, scoped, tag = 'internal scratch']
  #allocation2 [shape = 'f32[1]{0:T(128)S(6)}', space=smem, size = 0x200, scoped, tag = 'scoped memory for tpu_custom_call.1']
  %s0 = inlined_call_operand.vmem [shape: f32[8,8,1], index: 0, kind: input, shape index: {}]
  %s1 = inlined_call_operand.vmem [shape: f32[1,128], index: 1, kind: input, shape index: {}]
  %s2 = inlined_call_operand.vmem [shape: f32[32,128], index: 2, kind: input, shape index: {}]
  %s3 = inlined_call_operand.vmem [shape: f32[1,128], index: 3, kind: input, shape index: {}]
  %s4 = inlined_call_operand.vmem [shape: f32[1,32], index: 4, kind: input, shape index: {}]
  %s5 = inlined_call_operand.<no memory space> [shape: f32[1], index: 5, kind: input, shape index: {}]
  %s6 = inlined_call_operand.hbm [shape: f32[8,8], index: 6, kind: output, shape index: {}]
  %s7 = sld [smem:[#allocation0]]
  $region34: #{tpu_custom_call.1} parent=0
    _
  %s9 = ssub.s32 1, %s7
  %s10 = scalar_select 0, %s9, %s7
  %11 = sst [smem:[#allocation2]] %s5
  $region1: #{tpu_custom_call.1} parent=0
    #allocation3 [shape = 'u8[4096]{0}', space=vmem, size = 0x1000, scoped, tag = 'output window, operand 0, single buffered']
    #allocation4 [shape = 's32[1]{0}', space=sflag, size = 0x4, scoped, tag = 'scoped memory for tpu_custom_call.1']
    %12 = vsyncpa [#allocation4], 0
    // Predicated region
    $region2: #{tpu_custom_call.1} parent=1 // pred_check
      _
    $region3: #{tpu_custom_call.1} parent=1 // pred_check_branch
      %14 = sbr.rel (0) target = $region5
    $region4: #{tpu_custom_call.1} parent=1 // pred_region
      _
    $region5: #{tpu_custom_call.1} parent=1 // pred_fallthru
      _
    // Predicated region
    $region6: #{tpu_custom_call.1} parent=1 // pred_check
      _
    $region7: #{tpu_custom_call.1} parent=1 // pred_check_branch
      %16 = sbr.rel (0) target = $region9
    $region8: #{tpu_custom_call.1} parent=1 // pred_region
      _
    $region9: #{tpu_custom_call.1} parent=1 // pred_fallthru
      _
    // Predicated region
    $region10: #{tpu_custom_call.1} parent=1 // pred_check
      _
    $region11: #{tpu_custom_call.1} parent=1 // pred_check_branch
      %18 = sbr.rel (0) target = $region13
    $region12: #{tpu_custom_call.1} parent=1 // pred_region
      _
    $region13: #{tpu_custom_call.1} parent=1 // pred_fallthru
      _
    // Predicated region
    $region14: #{tpu_custom_call.1} parent=1 // pred_check
      _
    $region15: #{tpu_custom_call.1} parent=1 // pred_check_branch
      %20 = sbr.rel (0) target = $region17
    $region16: #{tpu_custom_call.1} parent=1 // pred_region
      _
    $region17: #{tpu_custom_call.1} parent=1 // pred_fallthru
      _
    // Predicated region
    $region18: #{tpu_custom_call.1} parent=1 // pred_check
      _
    $region19: #{tpu_custom_call.1} parent=1 // pred_check_branch
      %22 = sbr.rel (0) target = $region21
    $region20: #{tpu_custom_call.1} parent=1 // pred_region
      _
    $region21: #{tpu_custom_call.1} parent=1 // pred_fallthru
      _
    // Predicated region
    $region22: #{tpu_custom_call.1} parent=1 // pred_check
      _
    $region23: #{tpu_custom_call.1} parent=1 // pred_check_branch
      %24 = sbr.rel (0) target = $region25
    $region24: #{tpu_custom_call.1} parent=1 // pred_region
      _
    $region25: #{tpu_custom_call.1} parent=1 // pred_fallthru
      _
    %v25 = vld [vmem:[%s2] sm:$0xff]
    %v26 = vld [vmem:[%s2 + $0x8] sm:$0xff]
    %v27 = vld [vmem:[%s2 + $0x10] sm:$0xff]
    %v28 = vld [vmem:[%s2 + $0x18] sm:$0xff]
    %v29 = vld [vmem:[%s4] sm:$0x1]
    %v30 = vld [vmem:[%s3] sm:$0x1]
    %v32 = vlaneseq
    %v33 = vshrl.u32 %v32, 7
    %v34 = vsub.s32 0, %v33
    %v35 = vrot.slane %v30, %v34
    %v37 = vld [vmem:[%s0] sm:$0xff]
    %v38 = vld [vmem:[%s0 + $0x8] sm:$0xff]
    %v39 = vld [vmem:[%s0 + $0x10] sm:$0xff]
    %v40 = vld [vmem:[%s0 + $0x18] sm:$0xff]
    %v41 = vld [vmem:[%s0 + $0x20] sm:$0xff]
    %v42 = vld [vmem:[%s0 + $0x28] sm:$0xff]
    %v43 = vld [vmem:[%s0 + $0x30] sm:$0xff]
    %v44 = vld [vmem:[%s0 + $0x38] sm:$0xff]
    %v45 = vld [vmem:[%s1] sm:$0x1]
    %47 = vset.pattern.permute.xlu0 0
    %48 = vperm.xlu0 %47, %v37
    %v49 = vpop.permute.xlu0 %48
    %52 = vset.pattern.permute.xlu0 0
    %53 = vperm.xlu0 %52, %v38
    %v54 = vpop.permute.xlu0 %53
    %57 = vset.pattern.permute.xlu0 0
    %58 = vperm.xlu0 %57, %v39
    %v59 = vpop.permute.xlu0 %58
    %62 = vset.pattern.permute.xlu0 0
    %63 = vperm.xlu0 %62, %v40
    %v64 = vpop.permute.xlu0 %63
    %67 = vset.pattern.permute.xlu0 0
    %68 = vperm.xlu0 %67, %v41
    %v69 = vpop.permute.xlu0 %68
    %72 = vset.pattern.permute.xlu0 0
    %73 = vperm.xlu0 %72, %v42
    %v74 = vpop.permute.xlu0 %73
    %77 = vset.pattern.permute.xlu0 0
    %78 = vperm.xlu0 %77, %v43
    %v79 = vpop.permute.xlu0 %78
    %82 = vset.pattern.permute.xlu0 0
    %83 = vperm.xlu0 %82, %v44
    %v84 = vpop.permute.xlu0 %83
    %v87 = vlaneseq
    %v88 = vshrl.u32 %v87, 7
    %v89 = vsub.s32 0, %v88
    %v90 = vrot.slane %v45, %v89
    %v92 = vmul.f32 %v49, %v90
    %v93 = vmul.f32 %v54, %v90
    %v94 = vmul.f32 %v59, %v90
    %v95 = vmul.f32 %v64, %v90
    %v96 = vmul.f32 %v69, %v90
    %v97 = vmul.f32 %v74, %v90
    %v98 = vmul.f32 %v79, %v90
    %v99 = vmul.f32 %v84, %v90
    %v100 = vadd.f32 %v35, %v92
    %v101 = vadd.f32 %v35, %v93
    %v102 = vadd.f32 %v35, %v94
    %v103 = vadd.f32 %v35, %v95
    %v104 = vadd.f32 %v35, %v96
    %v105 = vadd.f32 %v35, %v97
    %v106 = vadd.f32 %v35, %v98
    %v107 = vadd.f32 %v35, %v99
    %vm108 = vcmask 261120
    %v110 = vsel %vm108, 0.0, 0
    %112 = vmatprep.subr.mxu0 0.0
    %113 = vmatpush1.msra.mxu0 0.0
    %114 = vmatprep.subr.mxu0 0.0
    %115 = vmatpush1.msra.mxu0 0.0
    %116 = vmatprep.subr.mxu0 0.0
    %117 = vmatpush1.msra.mxu0 0.0
    %118 = vmatprep.subr.mxu0 0.0
    %119 = vmatpush1.msra.mxu0 0.0
    %120 = vmatprep.subr.mxu0 0.0
    %121 = vmatpush1.msra.mxu0 0.0
    %122 = vmatprep.subr.mxu0 0.0
    %123 = vmatpush1.msra.mxu0 0.0
    %124 = vmatprep.subr.mxu0 0.0
    %125 = vmatpush1.msra.mxu0 0.0
    %126 = vmatprep.subr.mxu0 0.0
    %127 = vmatpush1.msra.mxu0 0.0
    %128 = vmatprep.subr.mxu0 0.0
    %129 = vmatpush1.msra.mxu0 0.0
    %130 = vmatprep.subr.mxu0 0.0
    %131 = vmatpush1.msra.mxu0 0.0
    %132 = vmatprep.subr.mxu0 0.0
    %133 = vmatpush1.msra.mxu0 0.0
    %134 = vmatprep.subr.mxu0 0.0
    %135 = vmatpush1.msra.mxu0 0.0
    %136 = vmatprep.subr.mxu0 0.0
    %137 = vmatpush1.msra.mxu0 %v28
    %138 = vmatprep.subr.mxu0 0.0
    %139 = vmatpush1.msra.mxu0 %v27
    %140 = vmatprep.subr.mxu0 0.0
    %141 = vmatpush1.msra.mxu0 %v26
    %142 = vmatprep.subr.mxu0 0.0
    %143 = vmatpush1.msra.mxu0 %v25
    %144 = vmatprep.subr.mxu0 0.0
    %145 = vmatpush2.msra.mxu0 0.0
    %146 = vmatprep.subr.mxu0 0.0
    %147 = vmatpush2.msra.mxu0 0.0
    %148 = vmatprep.subr.mxu0 0.0
    %149 = vmatpush2.msra.mxu0 0.0
    %150 = vmatprep.subr.mxu0 0.0
    %151 = vmatpush2.msra.mxu0 0.0
    %152 = vmatprep.subr.mxu0 0.0
    %153 = vmatpush2.msra.mxu0 0.0
    %154 = vmatprep.subr.mxu0 0.0
    %155 = vmatpush2.msra.mxu0 0.0
    %156 = vmatprep.subr.mxu0 0.0
    %157 = vmatpush2.msra.mxu0 0.0
    %158 = vmatprep.subr.mxu0 0.0
    %159 = vmatpush2.msra.mxu0 0.0
    %160 = vmatprep.subr.mxu0 0.0
    %161 = vmatpush2.msra.mxu0 0.0
    %162 = vmatprep.subr.mxu0 0.0
    %163 = vmatpush2.msra.mxu0 0.0
    %164 = vmatprep.subr.mxu0 0.0
    %165 = vmatpush2.msra.mxu0 0.0
    %166 = vmatprep.subr.mxu0 0.0
    %167 = vmatpush2.msra.mxu0 0.0
    %168 = vmatprep.subr.mxu0 0.0
    %169 = vmatpush2.msra.mxu0 0.0
    %170 = vmatprep.subr.mxu0 0.0
    %171 = vmatpush2.msra.mxu0 0.0
    %172 = vmatprep.subr.mxu0 0.0
    %173 = vmatpush2.msra.mxu0 0.0
    %174 = vmatprep.subr.mxu0 0.0
    %175 = vmatpush2.msra.mxu0 0.0
    %176 = vmatprep.mubr.f32.mxu0 0.0
    %177 = vmatmul.mubr.f32.gmra.mxu0 %v110
    %v178 = vpop.f32.mrf.mxu0
    %v179 = vadd.f32 0.0, %v178
    %v180 = vpop.f32.mrf.mxu0
    %181 = vdwg.mxu0
    %v182 = vadd.f32 %v100, %v179
    %v183 = vmul.f32 %v182, 0.5
    %v184 = vtanh.pop %v183
    %v185 = vmul.f32 %v184, 0.5
    %v186 = vadd.f32 %v185, 0.5
    %v187 = vtanh.pop %v182
    %v188 = vmul.f32 %v186, 0.0
    %190 = vrot.lane.b32.xlu0 %v187, 64
    %v191 = vpop.permute.xlu0 %190
    %v193 = vmul.f32 %v186, %v191
    %195 = vrot.lane.b32.xlu0 %v193, 32
    %v196 = vpop.permute.xlu0 %195
    %v198 = vadd.f32 %v188, %v196
    %v199 = vtanh.pop %v198
    %201 = vrot.lane.b32.xlu0 %v199, 64
    %v202 = vpop.permute.xlu0 %201
    %v204 = vmul.f32 %v186, %v202
    %206 = vrot.lane.b32.xlu0 %v204, 32
    %v207 = vpop.permute.xlu0 %206
    %v208 = vsel %vm108, %v207, 0
    %210 = vmatprep.subr.mxu0 0.0
    %211 = vmatpush1.msra.mxu0 0.0
    %212 = vmatprep.subr.mxu0 0.0
    %213 = vmatpush1.msra.mxu0 0.0
    %214 = vmatprep.subr.mxu0 0.0
    %215 = vmatpush1.msra.mxu0 0.0
    %216 = vmatprep.subr.mxu0 0.0
    %217 = vmatpush1.msra.mxu0 0.0
    %218 = vmatprep.subr.mxu0 0.0
    %219 = vmatpush1.msra.mxu0 0.0
    %220 = vmatprep.subr.mxu0 0.0
    %221 = vmatpush1.msra.mxu0 0.0
    %222 = vmatprep.subr.mxu0 0.0
    %223 = vmatpush1.msra.mxu0 0.0
    %224 = vmatprep.subr.mxu0 0.0
    %225 = vmatpush1.msra.mxu0 0.0
    %226 = vmatprep.subr.mxu0 0.0
    %227 = vmatpush1.msra.mxu0 0.0
    %228 = vmatprep.subr.mxu0 0.0
    %229 = vmatpush1.msra.mxu0 0.0
    %230 = vmatprep.subr.mxu0 0.0
    %231 = vmatpush1.msra.mxu0 0.0
    %232 = vmatprep.subr.mxu0 0.0
    %233 = vmatpush1.msra.mxu0 0.0
    %234 = vmatprep.subr.mxu0 0.0
    %235 = vmatpush1.msra.mxu0 %v28
    %236 = vmatprep.subr.mxu0 0.0
    %237 = vmatpush1.msra.mxu0 %v27
    %238 = vmatprep.subr.mxu0 0.0
    %239 = vmatpush1.msra.mxu0 %v26
    %240 = vmatprep.subr.mxu0 0.0
    %241 = vmatpush1.msra.mxu0 %v25
    %242 = vmatprep.subr.mxu0 0.0
    %243 = vmatpush2.msra.mxu0 0.0
    %244 = vmatprep.subr.mxu0 0.0
    %245 = vmatpush2.msra.mxu0 0.0
    %246 = vmatprep.subr.mxu0 0.0
    %247 = vmatpush2.msra.mxu0 0.0
    %248 = vmatprep.subr.mxu0 0.0
    %249 = vmatpush2.msra.mxu0 0.0
    %250 = vmatprep.subr.mxu0 0.0
    %251 = vmatpush2.msra.mxu0 0.0
    %252 = vmatprep.subr.mxu0 0.0
    %253 = vmatpush2.msra.mxu0 0.0
    %254 = vmatprep.subr.mxu0 0.0
    %255 = vmatpush2.msra.mxu0 0.0
    %256 = vmatprep.subr.mxu0 0.0
    %257 = vmatpush2.msra.mxu0 0.0
    %258 = vmatprep.subr.mxu0 0.0
    %259 = vmatpush2.msra.mxu0 0.0
    %260 = vmatprep.subr.mxu0 0.0
    %261 = vmatpush2.msra.mxu0 0.0
    %262 = vmatprep.subr.mxu0 0.0
    %263 = vmatpush2.msra.mxu0 0.0
    %264 = vmatprep.subr.mxu0 0.0
    %265 = vmatpush2.msra.mxu0 0.0
    %266 = vmatprep.subr.mxu0 0.0
    %267 = vmatpush2.msra.mxu0 0.0
    %268 = vmatprep.subr.mxu0 0.0
    %269 = vmatpush2.msra.mxu0 0.0
    %270 = vmatprep.subr.mxu0 0.0
    %271 = vmatpush2.msra.mxu0 0.0
    %272 = vmatprep.subr.mxu0 0.0
    %273 = vmatpush2.msra.mxu0 0.0
    %274 = vmatprep.mubr.f32.mxu0 0.0
    %275 = vmatmul.mubr.f32.gmra.mxu0 %v208
    %v276 = vpop.f32.mrf.mxu0
    %v277 = vadd.f32 0.0, %v276
    %v278 = vpop.f32.mrf.mxu0
    %279 = vdwg.mxu0
    %v280 = vadd.f32 %v101, %v277
    %v281 = vmul.f32 %v280, 0.5
    %v282 = vtanh.pop %v281
    %v283 = vmul.f32 %v282, 0.5
    %v284 = vadd.f32 %v283, 0.5
    %v285 = vtanh.pop %v280
    %v286 = vmul.f32 %v284, %v198
    %288 = vrot.lane.b32.xlu0 %v285, 64
    %v289 = vpop.permute.xlu0 %288
    %v291 = vmul.f32 %v284, %v289
    %293 = vrot.lane.b32.xlu0 %v291, 32
    %v294 = vpop.permute.xlu0 %293
    %v296 = vadd.f32 %v286, %v294
    %v297 = vtanh.pop %v296
    %299 = vrot.lane.b32.xlu0 %v297, 64
    %v300 = vpop.permute.xlu0 %299
    %v302 = vmul.f32 %v284, %v300
    %304 = vrot.lane.b32.xlu0 %v302, 32
    %v305 = vpop.permute.xlu0 %304
    %v306 = vsel %vm108, %v305, 0
    %308 = vmatprep.subr.mxu0 0.0
    %309 = vmatpush1.msra.mxu0 0.0
    %310 = vmatprep.subr.mxu0 0.0
    %311 = vmatpush1.msra.mxu0 0.0
    %312 = vmatprep.subr.mxu0 0.0
    %313 = vmatpush1.msra.mxu0 0.0
    %314 = vmatprep.subr.mxu0 0.0
    %315 = vmatpush1.msra.mxu0 0.0
    %316 = vmatprep.subr.mxu0 0.0
    %317 = vmatpush1.msra.mxu0 0.0
    %318 = vmatprep.subr.mxu0 0.0
    %319 = vmatpush1.msra.mxu0 0.0
    %320 = vmatprep.subr.mxu0 0.0
    %321 = vmatpush1.msra.mxu0 0.0
    %322 = vmatprep.subr.mxu0 0.0
    %323 = vmatpush1.msra.mxu0 0.0
    %324 = vmatprep.subr.mxu0 0.0
    %325 = vmatpush1.msra.mxu0 0.0
    %326 = vmatprep.subr.mxu0 0.0
    %327 = vmatpush1.msra.mxu0 0.0
    %328 = vmatprep.subr.mxu0 0.0
    %329 = vmatpush1.msra.mxu0 0.0
    %330 = vmatprep.subr.mxu0 0.0
    %331 = vmatpush1.msra.mxu0 0.0
    %332 = vmatprep.subr.mxu0 0.0
    %333 = vmatpush1.msra.mxu0 %v28
    %334 = vmatprep.subr.mxu0 0.0
    %335 = vmatpush1.msra.mxu0 %v27
    %336 = vmatprep.subr.mxu0 0.0
    %337 = vmatpush1.msra.mxu0 %v26
    %338 = vmatprep.subr.mxu0 0.0
    %339 = vmatpush1.msra.mxu0 %v25
    %340 = vmatprep.subr.mxu0 0.0
    %341 = vmatpush2.msra.mxu0 0.0
    %342 = vmatprep.subr.mxu0 0.0
    %343 = vmatpush2.msra.mxu0 0.0
    %344 = vmatprep.subr.mxu0 0.0
    %345 = vmatpush2.msra.mxu0 0.0
    %346 = vmatprep.subr.mxu0 0.0
    %347 = vmatpush2.msra.mxu0 0.0
    %348 = vmatprep.subr.mxu0 0.0
    %349 = vmatpush2.msra.mxu0 0.0
    %350 = vmatprep.subr.mxu0 0.0
    %351 = vmatpush2.msra.mxu0 0.0
    %352 = vmatprep.subr.mxu0 0.0
    %353 = vmatpush2.msra.mxu0 0.0
    %354 = vmatprep.subr.mxu0 0.0
    %355 = vmatpush2.msra.mxu0 0.0
    %356 = vmatprep.subr.mxu0 0.0
    %357 = vmatpush2.msra.mxu0 0.0
    %358 = vmatprep.subr.mxu0 0.0
    %359 = vmatpush2.msra.mxu0 0.0
    %360 = vmatprep.subr.mxu0 0.0
    %361 = vmatpush2.msra.mxu0 0.0
    %362 = vmatprep.subr.mxu0 0.0
    %363 = vmatpush2.msra.mxu0 0.0
    %364 = vmatprep.subr.mxu0 0.0
    %365 = vmatpush2.msra.mxu0 0.0
    %366 = vmatprep.subr.mxu0 0.0
    %367 = vmatpush2.msra.mxu0 0.0
    %368 = vmatprep.subr.mxu0 0.0
    %369 = vmatpush2.msra.mxu0 0.0
    %370 = vmatprep.subr.mxu0 0.0
    %371 = vmatpush2.msra.mxu0 0.0
    %372 = vmatprep.mubr.f32.mxu0 0.0
    %373 = vmatmul.mubr.f32.gmra.mxu0 %v306
    %v374 = vpop.f32.mrf.mxu0
    %v375 = vadd.f32 0.0, %v374
    %v376 = vpop.f32.mrf.mxu0
    %377 = vdwg.mxu0
    %v378 = vadd.f32 %v102, %v375
    %v379 = vmul.f32 %v378, 0.5
    %v380 = vtanh.pop %v379
    %v381 = vmul.f32 %v380, 0.5
    %v382 = vadd.f32 %v381, 0.5
    %v383 = vtanh.pop %v378
    %v384 = vmul.f32 %v382, %v296
    %386 = vrot.lane.b32.xlu0 %v383, 64
    %v387 = vpop.permute.xlu0 %386
    %v389 = vmul.f32 %v382, %v387
    %391 = vrot.lane.b32.xlu0 %v389, 32
    %v392 = vpop.permute.xlu0 %391
    %v394 = vadd.f32 %v384, %v392
    %v395 = vtanh.pop %v394
    %397 = vrot.lane.b32.xlu0 %v395, 64
    %v398 = vpop.permute.xlu0 %397
    %v400 = vmul.f32 %v382, %v398
    %402 = vrot.lane.b32.xlu0 %v400, 32
    %v403 = vpop.permute.xlu0 %402
    %v404 = vsel %vm108, %v403, 0
    %406 = vmatprep.subr.mxu0 0.0
    %407 = vmatpush1.msra.mxu0 0.0
    %408 = vmatprep.subr.mxu0 0.0
    %409 = vmatpush1.msra.mxu0 0.0
    %410 = vmatprep.subr.mxu0 0.0
    %411 = vmatpush1.msra.mxu0 0.0
    %412 = vmatprep.subr.mxu0 0.0
    %413 = vmatpush1.msra.mxu0 0.0
    %414 = vmatprep.subr.mxu0 0.0
    %415 = vmatpush1.msra.mxu0 0.0
    %416 = vmatprep.subr.mxu0 0.0
    %417 = vmatpush1.msra.mxu0 0.0
    %418 = vmatprep.subr.mxu0 0.0
    %419 = vmatpush1.msra.mxu0 0.0
    %420 = vmatprep.subr.mxu0 0.0
    %421 = vmatpush1.msra.mxu0 0.0
    %422 = vmatprep.subr.mxu0 0.0
    %423 = vmatpush1.msra.mxu0 0.0
    %424 = vmatprep.subr.mxu0 0.0
    %425 = vmatpush1.msra.mxu0 0.0
    %426 = vmatprep.subr.mxu0 0.0
    %427 = vmatpush1.msra.mxu0 0.0
    %428 = vmatprep.subr.mxu0 0.0
    %429 = vmatpush1.msra.mxu0 0.0
    %430 = vmatprep.subr.mxu0 0.0
    %431 = vmatpush1.msra.mxu0 %v28
    %432 = vmatprep.subr.mxu0 0.0
    %433 = vmatpush1.msra.mxu0 %v27
    %434 = vmatprep.subr.mxu0 0.0
    %435 = vmatpush1.msra.mxu0 %v26
    %436 = vmatprep.subr.mxu0 0.0
    %437 = vmatpush1.msra.mxu0 %v25
    %438 = vmatprep.subr.mxu0 0.0
    %439 = vmatpush2.msra.mxu0 0.0
    %440 = vmatprep.subr.mxu0 0.0
    %441 = vmatpush2.msra.mxu0 0.0
    %442 = vmatprep.subr.mxu0 0.0
    %443 = vmatpush2.msra.mxu0 0.0
    %444 = vmatprep.subr.mxu0 0.0
    %445 = vmatpush2.msra.mxu0 0.0
    %446 = vmatprep.subr.mxu0 0.0
    %447 = vmatpush2.msra.mxu0 0.0
    %448 = vmatprep.subr.mxu0 0.0
    %449 = vmatpush2.msra.mxu0 0.0
    %450 = vmatprep.subr.mxu0 0.0
    %451 = vmatpush2.msra.mxu0 0.0
    %452 = vmatprep.subr.mxu0 0.0
    %453 = vmatpush2.msra.mxu0 0.0
    %454 = vmatprep.subr.mxu0 0.0
    %455 = vmatpush2.msra.mxu0 0.0
    %456 = vmatprep.subr.mxu0 0.0
    %457 = vmatpush2.msra.mxu0 0.0
    %458 = vmatprep.subr.mxu0 0.0
    %459 = vmatpush2.msra.mxu0 0.0
    %460 = vmatprep.subr.mxu0 0.0
    %461 = vmatpush2.msra.mxu0 0.0
    %462 = vmatprep.subr.mxu0 0.0
    %463 = vmatpush2.msra.mxu0 0.0
    %464 = vmatprep.subr.mxu0 0.0
    %465 = vmatpush2.msra.mxu0 0.0
    %466 = vmatprep.subr.mxu0 0.0
    %467 = vmatpush2.msra.mxu0 0.0
    %468 = vmatprep.subr.mxu0 0.0
    %469 = vmatpush2.msra.mxu0 0.0
    %470 = vmatprep.mubr.f32.mxu0 0.0
    %471 = vmatmul.mubr.f32.gmra.mxu0 %v404
    %v472 = vpop.f32.mrf.mxu0
    %v473 = vadd.f32 0.0, %v472
    %v474 = vpop.f32.mrf.mxu0
    %475 = vdwg.mxu0
    %v476 = vadd.f32 %v103, %v473
    %v477 = vmul.f32 %v476, 0.5
    %v478 = vtanh.pop %v477
    %v479 = vmul.f32 %v478, 0.5
    %v480 = vadd.f32 %v479, 0.5
    %v481 = vtanh.pop %v476
    %v482 = vmul.f32 %v480, %v394
    %484 = vrot.lane.b32.xlu0 %v481, 64
    %v485 = vpop.permute.xlu0 %484
    %v487 = vmul.f32 %v480, %v485
    %489 = vrot.lane.b32.xlu0 %v487, 32
    %v490 = vpop.permute.xlu0 %489
    %v492 = vadd.f32 %v482, %v490
    %v493 = vtanh.pop %v492
    %495 = vrot.lane.b32.xlu0 %v493, 64
    %v496 = vpop.permute.xlu0 %495
    %v498 = vmul.f32 %v480, %v496
    %500 = vrot.lane.b32.xlu0 %v498, 32
    %v501 = vpop.permute.xlu0 %500
    %v502 = vsel %vm108, %v501, 0
    %504 = vmatprep.subr.mxu0 0.0
    %505 = vmatpush1.msra.mxu0 0.0
    %506 = vmatprep.subr.mxu0 0.0
    %507 = vmatpush1.msra.mxu0 0.0
    %508 = vmatprep.subr.mxu0 0.0
    %509 = vmatpush1.msra.mxu0 0.0
    %510 = vmatprep.subr.mxu0 0.0
    %511 = vmatpush1.msra.mxu0 0.0
    %512 = vmatprep.subr.mxu0 0.0
    %513 = vmatpush1.msra.mxu0 0.0
    %514 = vmatprep.subr.mxu0 0.0
    %515 = vmatpush1.msra.mxu0 0.0
    %516 = vmatprep.subr.mxu0 0.0
    %517 = vmatpush1.msra.mxu0 0.0
    %518 = vmatprep.subr.mxu0 0.0
    %519 = vmatpush1.msra.mxu0 0.0
    %520 = vmatprep.subr.mxu0 0.0
    %521 = vmatpush1.msra.mxu0 0.0
    %522 = vmatprep.subr.mxu0 0.0
    %523 = vmatpush1.msra.mxu0 0.0
    %524 = vmatprep.subr.mxu0 0.0
    %525 = vmatpush1.msra.mxu0 0.0
    %526 = vmatprep.subr.mxu0 0.0
    %527 = vmatpush1.msra.mxu0 0.0
    %528 = vmatprep.subr.mxu0 0.0
    %529 = vmatpush1.msra.mxu0 %v28
    %530 = vmatprep.subr.mxu0 0.0
    %531 = vmatpush1.msra.mxu0 %v27
    %532 = vmatprep.subr.mxu0 0.0
    %533 = vmatpush1.msra.mxu0 %v26
    %534 = vmatprep.subr.mxu0 0.0
    %535 = vmatpush1.msra.mxu0 %v25
    %536 = vmatprep.subr.mxu0 0.0
    %537 = vmatpush2.msra.mxu0 0.0
    %538 = vmatprep.subr.mxu0 0.0
    %539 = vmatpush2.msra.mxu0 0.0
    %540 = vmatprep.subr.mxu0 0.0
    %541 = vmatpush2.msra.mxu0 0.0
    %542 = vmatprep.subr.mxu0 0.0
    %543 = vmatpush2.msra.mxu0 0.0
    %544 = vmatprep.subr.mxu0 0.0
    %545 = vmatpush2.msra.mxu0 0.0
    %546 = vmatprep.subr.mxu0 0.0
    %547 = vmatpush2.msra.mxu0 0.0
    %548 = vmatprep.subr.mxu0 0.0
    %549 = vmatpush2.msra.mxu0 0.0
    %550 = vmatprep.subr.mxu0 0.0
    %551 = vmatpush2.msra.mxu0 0.0
    %552 = vmatprep.subr.mxu0 0.0
    %553 = vmatpush2.msra.mxu0 0.0
    %554 = vmatprep.subr.mxu0 0.0
    %555 = vmatpush2.msra.mxu0 0.0
    %556 = vmatprep.subr.mxu0 0.0
    %557 = vmatpush2.msra.mxu0 0.0
    %558 = vmatprep.subr.mxu0 0.0
    %559 = vmatpush2.msra.mxu0 0.0
    %560 = vmatprep.subr.mxu0 0.0
    %561 = vmatpush2.msra.mxu0 0.0
    %562 = vmatprep.subr.mxu0 0.0
    %563 = vmatpush2.msra.mxu0 0.0
    %564 = vmatprep.subr.mxu0 0.0
    %565 = vmatpush2.msra.mxu0 0.0
    %566 = vmatprep.subr.mxu0 0.0
    %567 = vmatpush2.msra.mxu0 0.0
    %568 = vmatprep.mubr.f32.mxu0 0.0
    %569 = vmatmul.mubr.f32.gmra.mxu0 %v502
    %v570 = vpop.f32.mrf.mxu0
    %v571 = vadd.f32 0.0, %v570
    %v572 = vpop.f32.mrf.mxu0
    %573 = vdwg.mxu0
    %v574 = vadd.f32 %v104, %v571
    %v575 = vmul.f32 %v574, 0.5
    %v576 = vtanh.pop %v575
    %v577 = vmul.f32 %v576, 0.5
    %v578 = vadd.f32 %v577, 0.5
    %v579 = vtanh.pop %v574
    %v580 = vmul.f32 %v578, %v492
    %582 = vrot.lane.b32.xlu0 %v579, 64
    %v583 = vpop.permute.xlu0 %582
    %v585 = vmul.f32 %v578, %v583
    %587 = vrot.lane.b32.xlu0 %v585, 32
    %v588 = vpop.permute.xlu0 %587
    %v590 = vadd.f32 %v580, %v588
    %v591 = vtanh.pop %v590
    %593 = vrot.lane.b32.xlu0 %v591, 64
    %v594 = vpop.permute.xlu0 %593
    %v596 = vmul.f32 %v578, %v594
    %598 = vrot.lane.b32.xlu0 %v596, 32
    %v599 = vpop.permute.xlu0 %598
    %v600 = vsel %vm108, %v599, 0
    %602 = vmatprep.subr.mxu0 0.0
    %603 = vmatpush1.msra.mxu0 0.0
    %604 = vmatprep.subr.mxu0 0.0
    %605 = vmatpush1.msra.mxu0 0.0
    %606 = vmatprep.subr.mxu0 0.0
    %607 = vmatpush1.msra.mxu0 0.0
    %608 = vmatprep.subr.mxu0 0.0
    %609 = vmatpush1.msra.mxu0 0.0
    %610 = vmatprep.subr.mxu0 0.0
    %611 = vmatpush1.msra.mxu0 0.0
    %612 = vmatprep.subr.mxu0 0.0
    %613 = vmatpush1.msra.mxu0 0.0
    %614 = vmatprep.subr.mxu0 0.0
    %615 = vmatpush1.msra.mxu0 0.0
    %616 = vmatprep.subr.mxu0 0.0
    %617 = vmatpush1.msra.mxu0 0.0
    %618 = vmatprep.subr.mxu0 0.0
    %619 = vmatpush1.msra.mxu0 0.0
    %620 = vmatprep.subr.mxu0 0.0
    %621 = vmatpush1.msra.mxu0 0.0
    %622 = vmatprep.subr.mxu0 0.0
    %623 = vmatpush1.msra.mxu0 0.0
    %624 = vmatprep.subr.mxu0 0.0
    %625 = vmatpush1.msra.mxu0 0.0
    %626 = vmatprep.subr.mxu0 0.0
    %627 = vmatpush1.msra.mxu0 %v28
    %628 = vmatprep.subr.mxu0 0.0
    %629 = vmatpush1.msra.mxu0 %v27
    %630 = vmatprep.subr.mxu0 0.0
    %631 = vmatpush1.msra.mxu0 %v26
    %632 = vmatprep.subr.mxu0 0.0
    %633 = vmatpush1.msra.mxu0 %v25
    %634 = vmatprep.subr.mxu0 0.0
    %635 = vmatpush2.msra.mxu0 0.0
    %636 = vmatprep.subr.mxu0 0.0
    %637 = vmatpush2.msra.mxu0 0.0
    %638 = vmatprep.subr.mxu0 0.0
    %639 = vmatpush2.msra.mxu0 0.0
    %640 = vmatprep.subr.mxu0 0.0
    %641 = vmatpush2.msra.mxu0 0.0
    %642 = vmatprep.subr.mxu0 0.0
    %643 = vmatpush2.msra.mxu0 0.0
    %644 = vmatprep.subr.mxu0 0.0
    %645 = vmatpush2.msra.mxu0 0.0
    %646 = vmatprep.subr.mxu0 0.0
    %647 = vmatpush2.msra.mxu0 0.0
    %648 = vmatprep.subr.mxu0 0.0
    %649 = vmatpush2.msra.mxu0 0.0
    %650 = vmatprep.subr.mxu0 0.0
    %651 = vmatpush2.msra.mxu0 0.0
    %652 = vmatprep.subr.mxu0 0.0
    %653 = vmatpush2.msra.mxu0 0.0
    %654 = vmatprep.subr.mxu0 0.0
    %655 = vmatpush2.msra.mxu0 0.0
    %656 = vmatprep.subr.mxu0 0.0
    %657 = vmatpush2.msra.mxu0 0.0
    %658 = vmatprep.subr.mxu0 0.0
    %659 = vmatpush2.msra.mxu0 0.0
    %660 = vmatprep.subr.mxu0 0.0
    %661 = vmatpush2.msra.mxu0 0.0
    %662 = vmatprep.subr.mxu0 0.0
    %663 = vmatpush2.msra.mxu0 0.0
    %664 = vmatprep.subr.mxu0 0.0
    %665 = vmatpush2.msra.mxu0 0.0
    %666 = vmatprep.mubr.f32.mxu0 0.0
    %667 = vmatmul.mubr.f32.gmra.mxu0 %v600
    %v668 = vpop.f32.mrf.mxu0
    %v669 = vadd.f32 0.0, %v668
    %v670 = vpop.f32.mrf.mxu0
    %671 = vdwg.mxu0
    %v672 = vadd.f32 %v105, %v669
    %v673 = vmul.f32 %v672, 0.5
    %v674 = vtanh.pop %v673
    %v675 = vmul.f32 %v674, 0.5
    %v676 = vadd.f32 %v675, 0.5
    %v677 = vtanh.pop %v672
    %v678 = vmul.f32 %v676, %v590
    %680 = vrot.lane.b32.xlu0 %v677, 64
    %v681 = vpop.permute.xlu0 %680
    %v683 = vmul.f32 %v676, %v681
    %685 = vrot.lane.b32.xlu0 %v683, 32
    %v686 = vpop.permute.xlu0 %685
    %v688 = vadd.f32 %v678, %v686
    %v689 = vtanh.pop %v688
    %691 = vrot.lane.b32.xlu0 %v689, 64
    %v692 = vpop.permute.xlu0 %691
    %v694 = vmul.f32 %v676, %v692
    %696 = vrot.lane.b32.xlu0 %v694, 32
    %v697 = vpop.permute.xlu0 %696
    %v698 = vsel %vm108, %v697, 0
    %700 = vmatprep.subr.mxu0 0.0
    %701 = vmatpush1.msra.mxu0 0.0
    %702 = vmatprep.subr.mxu0 0.0
    %703 = vmatpush1.msra.mxu0 0.0
    %704 = vmatprep.subr.mxu0 0.0
    %705 = vmatpush1.msra.mxu0 0.0
    %706 = vmatprep.subr.mxu0 0.0
    %707 = vmatpush1.msra.mxu0 0.0
    %708 = vmatprep.subr.mxu0 0.0
    %709 = vmatpush1.msra.mxu0 0.0
    %710 = vmatprep.subr.mxu0 0.0
    %711 = vmatpush1.msra.mxu0 0.0
    %712 = vmatprep.subr.mxu0 0.0
    %713 = vmatpush1.msra.mxu0 0.0
    %714 = vmatprep.subr.mxu0 0.0
    %715 = vmatpush1.msra.mxu0 0.0
    %716 = vmatprep.subr.mxu0 0.0
    %717 = vmatpush1.msra.mxu0 0.0
    %718 = vmatprep.subr.mxu0 0.0
    %719 = vmatpush1.msra.mxu0 0.0
    %720 = vmatprep.subr.mxu0 0.0
    %721 = vmatpush1.msra.mxu0 0.0
    %722 = vmatprep.subr.mxu0 0.0
    %723 = vmatpush1.msra.mxu0 0.0
    %724 = vmatprep.subr.mxu0 0.0
    %725 = vmatpush1.msra.mxu0 %v28
    %726 = vmatprep.subr.mxu0 0.0
    %727 = vmatpush1.msra.mxu0 %v27
    %728 = vmatprep.subr.mxu0 0.0
    %729 = vmatpush1.msra.mxu0 %v26
    %730 = vmatprep.subr.mxu0 0.0
    %731 = vmatpush1.msra.mxu0 %v25
    %732 = vmatprep.subr.mxu0 0.0
    %733 = vmatpush2.msra.mxu0 0.0
    %734 = vmatprep.subr.mxu0 0.0
    %735 = vmatpush2.msra.mxu0 0.0
    %736 = vmatprep.subr.mxu0 0.0
    %737 = vmatpush2.msra.mxu0 0.0
    %738 = vmatprep.subr.mxu0 0.0
    %739 = vmatpush2.msra.mxu0 0.0
    %740 = vmatprep.subr.mxu0 0.0
    %741 = vmatpush2.msra.mxu0 0.0
    %742 = vmatprep.subr.mxu0 0.0
    %743 = vmatpush2.msra.mxu0 0.0
    %744 = vmatprep.subr.mxu0 0.0
    %745 = vmatpush2.msra.mxu0 0.0
    %746 = vmatprep.subr.mxu0 0.0
    %747 = vmatpush2.msra.mxu0 0.0
    %748 = vmatprep.subr.mxu0 0.0
    %749 = vmatpush2.msra.mxu0 0.0
    %750 = vmatprep.subr.mxu0 0.0
    %751 = vmatpush2.msra.mxu0 0.0
    %752 = vmatprep.subr.mxu0 0.0
    %753 = vmatpush2.msra.mxu0 0.0
    %754 = vmatprep.subr.mxu0 0.0
    %755 = vmatpush2.msra.mxu0 0.0
    %756 = vmatprep.subr.mxu0 0.0
    %757 = vmatpush2.msra.mxu0 0.0
    %758 = vmatprep.subr.mxu0 0.0
    %759 = vmatpush2.msra.mxu0 0.0
    %760 = vmatprep.subr.mxu0 0.0
    %761 = vmatpush2.msra.mxu0 0.0
    %762 = vmatprep.subr.mxu0 0.0
    %763 = vmatpush2.msra.mxu0 0.0
    %764 = vmatprep.mubr.f32.mxu0 0.0
    %765 = vmatmul.mubr.f32.gmra.mxu0 %v698
    %v766 = vpop.f32.mrf.mxu0
    %v767 = vadd.f32 0.0, %v766
    %v768 = vpop.f32.mrf.mxu0
    %769 = vdwg.mxu0
    %v770 = vadd.f32 %v106, %v767
    %v771 = vmul.f32 %v770, 0.5
    %v772 = vtanh.pop %v771
    %v773 = vmul.f32 %v772, 0.5
    %v774 = vadd.f32 %v773, 0.5
    %v775 = vtanh.pop %v770
    %v776 = vmul.f32 %v774, %v688
    %778 = vrot.lane.b32.xlu0 %v775, 64
    %v779 = vpop.permute.xlu0 %778
    %v781 = vmul.f32 %v774, %v779
    %783 = vrot.lane.b32.xlu0 %v781, 32
    %v784 = vpop.permute.xlu0 %783
    %v786 = vadd.f32 %v776, %v784
    %v787 = vtanh.pop %v786
    %789 = vrot.lane.b32.xlu0 %v787, 64
    %v790 = vpop.permute.xlu0 %789
    %v792 = vmul.f32 %v774, %v790
    %794 = vrot.lane.b32.xlu0 %v792, 32
    %v795 = vpop.permute.xlu0 %794
    %v796 = vsel %vm108, %v795, 0
    %798 = vmatprep.subr.mxu0 0.0
    %799 = vmatpush1.msra.mxu0 0.0
    %800 = vmatprep.subr.mxu0 0.0
    %801 = vmatpush1.msra.mxu0 0.0
    %802 = vmatprep.subr.mxu0 0.0
    %803 = vmatpush1.msra.mxu0 0.0
    %804 = vmatprep.subr.mxu0 0.0
    %805 = vmatpush1.msra.mxu0 0.0
    %806 = vmatprep.subr.mxu0 0.0
    %807 = vmatpush1.msra.mxu0 0.0
    %808 = vmatprep.subr.mxu0 0.0
    %809 = vmatpush1.msra.mxu0 0.0
    %810 = vmatprep.subr.mxu0 0.0
    %811 = vmatpush1.msra.mxu0 0.0
    %812 = vmatprep.subr.mxu0 0.0
    %813 = vmatpush1.msra.mxu0 0.0
    %814 = vmatprep.subr.mxu0 0.0
    %815 = vmatpush1.msra.mxu0 0.0
    %816 = vmatprep.subr.mxu0 0.0
    %817 = vmatpush1.msra.mxu0 0.0
    %818 = vmatprep.subr.mxu0 0.0
    %819 = vmatpush1.msra.mxu0 0.0
    %820 = vmatprep.subr.mxu0 0.0
    %821 = vmatpush1.msra.mxu0 0.0
    %822 = vmatprep.subr.mxu0 0.0
    %823 = vmatpush1.msra.mxu0 %v28
    %824 = vmatprep.subr.mxu0 0.0
    %825 = vmatpush1.msra.mxu0 %v27
    %826 = vmatprep.subr.mxu0 0.0
    %827 = vmatpush1.msra.mxu0 %v26
    %828 = vmatprep.subr.mxu0 0.0
    %829 = vmatpush1.msra.mxu0 %v25
    %830 = vmatprep.subr.mxu0 0.0
    %831 = vmatpush2.msra.mxu0 0.0
    %832 = vmatprep.subr.mxu0 0.0
    %833 = vmatpush2.msra.mxu0 0.0
    %834 = vmatprep.subr.mxu0 0.0
    %835 = vmatpush2.msra.mxu0 0.0
    %836 = vmatprep.subr.mxu0 0.0
    %837 = vmatpush2.msra.mxu0 0.0
    %838 = vmatprep.subr.mxu0 0.0
    %839 = vmatpush2.msra.mxu0 0.0
    %840 = vmatprep.subr.mxu0 0.0
    %841 = vmatpush2.msra.mxu0 0.0
    %842 = vmatprep.subr.mxu0 0.0
    %843 = vmatpush2.msra.mxu0 0.0
    %844 = vmatprep.subr.mxu0 0.0
    %845 = vmatpush2.msra.mxu0 0.0
    %846 = vmatprep.subr.mxu0 0.0
    %847 = vmatpush2.msra.mxu0 0.0
    %848 = vmatprep.subr.mxu0 0.0
    %849 = vmatpush2.msra.mxu0 0.0
    %850 = vmatprep.subr.mxu0 0.0
    %851 = vmatpush2.msra.mxu0 0.0
    %852 = vmatprep.subr.mxu0 0.0
    %853 = vmatpush2.msra.mxu0 0.0
    %854 = vmatprep.subr.mxu0 0.0
    %855 = vmatpush2.msra.mxu0 0.0
    %856 = vmatprep.subr.mxu0 0.0
    %857 = vmatpush2.msra.mxu0 0.0
    %858 = vmatprep.subr.mxu0 0.0
    %859 = vmatpush2.msra.mxu0 0.0
    %860 = vmatprep.subr.mxu0 0.0
    %861 = vmatpush2.msra.mxu0 0.0
    %862 = vmatprep.mubr.f32.mxu0 0.0
    %863 = vmatmul.mubr.f32.gmra.mxu0 %v796
    %v864 = vpop.f32.mrf.mxu0
    %v865 = vadd.f32 0.0, %v864
    %v866 = vpop.f32.mrf.mxu0
    %867 = vdwg.mxu0
    %v868 = vadd.f32 %v107, %v865
    %v869 = vmul.f32 %v868, 0.5
    %v870 = vtanh.pop %v869
    %v871 = vmul.f32 %v870, 0.5
    %v872 = vadd.f32 %v871, 0.5
    %v873 = vtanh.pop %v868
    %v874 = vmul.f32 %v872, %v786
    %876 = vrot.lane.b32.xlu0 %v873, 64
    %v877 = vpop.permute.xlu0 %876
    %v879 = vmul.f32 %v872, %v877
    %881 = vrot.lane.b32.xlu0 %v879, 32
    %v882 = vpop.permute.xlu0 %881
    %v884 = vadd.f32 %v874, %v882
    %v885 = vtanh.pop %v884
    %887 = vrot.lane.b32.xlu0 %v885, 64
    %v888 = vpop.permute.xlu0 %887
    %v890 = vmul.f32 %v872, %v888
    %v892 = vlaneseq
    %v893 = vshrl.u32 %v892, 7
    %v894 = vsub.s32 0, %v893
    %v895 = vrot.slane %v29, %v894
    %896 = vrot.lane.b32.xlu0 %v895, 96
    %v897 = vpop.permute.xlu0 %896
    %v899 = vmul.f32 %v204, %v897
    %v900 = vmul.f32 %v302, %v897
    %v901 = vmul.f32 %v400, %v897
    %v902 = vmul.f32 %v498, %v897
    %v903 = vmul.f32 %v596, %v897
    %v904 = vmul.f32 %v694, %v897
    %v905 = vmul.f32 %v792, %v897
    %v906 = vmul.f32 %v890, %v897
    %915 = vrot.lane.b32.xlu0 %v899, 32
    %v916 = vpop.permute.xlu0 %915
    %917 = vrot.lane.b32.xlu0 %v900, 32
    %v918 = vpop.permute.xlu0 %917
    %919 = vrot.lane.b32.xlu0 %v901, 32
    %v920 = vpop.permute.xlu0 %919
    %921 = vrot.lane.b32.xlu0 %v902, 32
    %v922 = vpop.permute.xlu0 %921
    %923 = vrot.lane.b32.xlu0 %v903, 32
    %v924 = vpop.permute.xlu0 %923
    %925 = vrot.lane.b32.xlu0 %v904, 32
    %v926 = vpop.permute.xlu0 %925
    %927 = vrot.lane.b32.xlu0 %v905, 32
    %v928 = vpop.permute.xlu0 %927
    %929 = vrot.lane.b32.xlu0 %v906, 32
    %v930 = vpop.permute.xlu0 %929
    %v939 = vsel %vm108, %v916, 0.0
    %940 = vadd.xlane.f32.xlu0 %v939
    %v941 = vpop.xlane.xlu0 %940
    %v942 = vsel %vm108, %v918, 0.0
    %943 = vadd.xlane.f32.xlu0 %v942
    %v944 = vpop.xlane.xlu0 %943
    %v945 = vsel %vm108, %v920, 0.0
    %946 = vadd.xlane.f32.xlu0 %v945
    %v947 = vpop.xlane.xlu0 %946
    %v948 = vsel %vm108, %v922, 0.0
    %949 = vadd.xlane.f32.xlu0 %v948
    %v950 = vpop.xlane.xlu0 %949
    %v951 = vsel %vm108, %v924, 0.0
    %952 = vadd.xlane.f32.xlu0 %v951
    %v953 = vpop.xlane.xlu0 %952
    %v954 = vsel %vm108, %v926, 0.0
    %955 = vadd.xlane.f32.xlu0 %v954
    %v956 = vpop.xlane.xlu0 %955
    %v957 = vsel %vm108, %v928, 0.0
    %958 = vadd.xlane.f32.xlu0 %v957
    %v959 = vpop.xlane.xlu0 %958
    %v960 = vsel %vm108, %v930, 0.0
    %961 = vadd.xlane.f32.xlu0 %v960
    %v962 = vpop.xlane.xlu0 %961
    %s963 = sld [smem:[#allocation2]]
    %v964 = vstv %s963
    %v965 = vadd.f32 %v941, %v964
    %v966 = vadd.f32 %v944, %v964
    %v967 = vadd.f32 %v947, %v964
    %v968 = vadd.f32 %v950, %v964
    %v969 = vadd.f32 %v953, %v964
    %v970 = vadd.f32 %v956, %v964
    %v971 = vadd.f32 %v959, %v964
    %v972 = vadd.f32 %v962, %v964
    %v981 = vlaneseq
    %v982 = vand.u32 %v981, 127
    %v983 = vlaneseq
    %v984 = vshrl.u32 %v983, 7
    %v985 = vsub.s32 %v982, %v984
    %v986 = vrot.slane %v965, %v985
    %v987 = vlaneseq
    %v988 = vshrl.u32 %v987, 7
    %v989 = vsub.s32 %v982, %v988
    %v990 = vrot.slane %v966, %v989
    %v991 = vlaneseq
    %v992 = vshrl.u32 %v991, 7
    %v993 = vsub.s32 %v982, %v992
    %v994 = vrot.slane %v967, %v993
    %v995 = vlaneseq
    %v996 = vshrl.u32 %v995, 7
    %v997 = vsub.s32 %v982, %v996
    %v998 = vrot.slane %v968, %v997
    %v999 = vlaneseq
    %v1000 = vshrl.u32 %v999, 7
    %v1001 = vsub.s32 %v982, %v1000
    %v1002 = vrot.slane %v969, %v1001
    %v1003 = vlaneseq
    %v1004 = vshrl.u32 %v1003, 7
    %v1005 = vsub.s32 %v982, %v1004
    %v1006 = vrot.slane %v970, %v1005
    %v1007 = vlaneseq
    %v1008 = vshrl.u32 %v1007, 7
    %v1009 = vsub.s32 %v982, %v1008
    %v1010 = vrot.slane %v971, %v1009
    %v1011 = vlaneseq
    %v1012 = vshrl.u32 %v1011, 7
    %v1013 = vsub.s32 %v982, %v1012
    %v1014 = vrot.slane %v972, %v1013
    %vm1015 = vcmask 1041409
    %v1016 = vsel %vm1015, %v990, %v986
    %vm1017 = vcmask 1042434
    %v1018 = vsel %vm1017, %v994, %v1016
    %vm1019 = vcmask 1043459
    %v1020 = vsel %vm1019, %v998, %v1018
    %vm1021 = vcmask 1044484
    %v1022 = vsel %vm1021, %v1002, %v1020
    %vm1023 = vcmask 1045509
    %v1024 = vsel %vm1023, %v1006, %v1022
    %vm1025 = vcmask 1046534
    %v1026 = vsel %vm1025, %v1010, %v1024
    %vm1027 = vcmask 1047559
    %v1028 = vsel %vm1027, %v1014, %v1026
    %vm1030 = vcmask 64512
    %1031 = vst.msk [vmem:[#allocation3] sm:$0xff] %vm1030, %v1028
    // Predicated region
    $region26: #{tpu_custom_call.1} parent=1 // pred_check
      _
    $region27: #{tpu_custom_call.1} parent=1 // pred_check_branch
      %1033 = sbr.rel (0) target = $region29
    $region28: #{tpu_custom_call.1} parent=1 // pred_region
      %s1035 = ssub.s32 128, 128
      %1036 = vsyncadd [#allocation4], %s1035
      %s1038 = sshll.u32 [#allocation3], 4
      %s1039 = int_to_ptr.vmem [resolvable:$true] %s1038
      %1041 = dma.vmem_to_hbm [thread:$0]  %s1039, 128, %s6, [#allocation4]
    $region29: #{tpu_custom_call.1} parent=1 // pred_fallthru
      _
    // Predicated region
    $region30: #{tpu_custom_call.1} parent=1 // pred_check
      _
    $region31: #{tpu_custom_call.1} parent=1 // pred_check_branch
      %1043 = sbr.rel (0) target = $region33
    $region32: #{tpu_custom_call.1} parent=1 // pred_region
      %1044 = dma.done [#allocation4], 128
    $region33: #{tpu_custom_call.1} parent=1 // pred_fallthru
      _
    %1045 = vsyncpa [#allocation4], 1

</llo_original>
